<compile_context>
chip_gen: v5e
topology: v5e:2x2
jax: 0.10.0
libtpu: 0.0.40
codegen_flags: <defaults>
</compile_context>

<pallas_src>
import jax
import jax.numpy as jnp
from jax.experimental import pallas as pl
from jax.experimental.pallas import tpu as pltpu

_LANE = 128


# ----------------------------------------------------------------------------
# Pallas kernel: fused (im2col-patches @ block-diag weight) + bias + ReLU
#   p_ref: (tm, Kg)   bf16     w_ref: (Kg, Cpad) bf16
#   b_ref: (1, Cpad)  f32      o_ref: (tm, Cpad) bf16   (Cpad multiple of 128)
# ----------------------------------------------------------------------------
def _conv_mm_kernel(p_ref, w_ref, b_ref, o_ref):
    acc = jnp.dot(p_ref[...], w_ref[...], preferred_element_type=jnp.float32)
    o_ref[...] = jnp.maximum(acc + b_ref[...], 0.0).astype(o_ref.dtype)


def _round_up(x, m):
    return -(-x // m) * m


def _pick_tm(m_rows, kg, cpad, *, max_tm=4096, min_steps=8, vmem_budget=24 << 20):
    """Row tile: multiple of 16 (bf16 native (16,128) tile), sized from VMEM.

    When the problem is large enough, targets >= min_steps grid steps
    (>= 4 per TensorCore on v7x) so the BlockSpec double-buffer overlaps
    DMA with MXU; otherwise uses the smallest tile covering all rows.
    """
    per_row = 2 * (kg * 2 + cpad * 2)            # double-buffered bf16 in + out
    budget_tm = max(16, (vmem_budget // per_row) // 16 * 16)
    tm = min(max_tm, budget_tm)
    if m_rows >= min_steps * 128:
        tm = min(tm, max(128, (m_rows // min_steps) // 16 * 16))
    else:
        tm = min(tm, _round_up(m_rows, 16))
    return max(16, tm)


def conv3x3_s2_relu_nhwc(x_nhwc, w_packed, b_packed, c_out, group):
    """3x3 conv, stride 2, pad 1, + bias + ReLU.  NHWC in / bf16 NHWC out.

    w_packed: (group*9*C, Cpad) bf16, block-diagonal over `group` output pixels
              (group = 128 // c_out when c_out divides 128) so the 128-lane
              output row is fully dense — no padded-channel writeback.
    b_packed: (1, Cpad) f32 (per-stage bias tiled `group` times).
    """
    N, H, W, C = x_nhwc.shape
    Kg, Cpad = w_packed.shape
    K = 9 * C
    assert Kg == group * K and Cpad % _LANE == 0 and group * c_out <= Cpad
    k, stride, pad = 3, 2, 1
    Ho = (H + 2 * pad - k) // stride + 1
    Wo = (W + 2 * pad - k) // stride + 1

    # ---- glue: im2col in bf16 (layout plumbing; kernel operands lane-dense) ----
    # TODO(synk): move im2col into the kernel via manual halo DMA of the padded
    #             NHWC band so this patch matrix never hits HBM.
    x = x_nhwc if x_nhwc.dtype == jnp.bfloat16 else x_nhwc.astype(jnp.bfloat16)
    xp = jnp.pad(x, ((0, 0), (pad, pad), (pad, pad), (0, 0)))
    taps = []
    for di in range(k):
        for dj in range(k):
            taps.append(
                xp[:, di:di + stride * Ho:stride, dj:dj + stride * Wo:stride, :])
    p = jnp.concatenate(taps, axis=-1).reshape(N * Ho * Wo, K)     # (M, 9C) bf16

    M = N * Ho * Wo
    Mg = pl.cdiv(M, group)                      # `group` pixels per matmul row
    tm = _pick_tm(Mg, Kg, Cpad)
    Mg_p = pl.cdiv(Mg, tm) * tm
    m_pad = Mg_p * group
    if m_pad != M:
        p = jnp.pad(p, ((0, m_pad - M), (0, 0)))
    pg = p.reshape(Mg_p, Kg)                    # (Mg_p, group*9C) bf16

    cost = pl.CostEstimate(
        flops=2 * Mg_p * Kg * Cpad,
        transcendentals=0,
        bytes_accessed=Mg_p * Kg * 2 + Kg * Cpad * 2 + Cpad * 4 + Mg_p * Cpad * 2,
    )
    # Size the VMEM request to actual need (+100% headroom), cap at 48 MiB so
    # v7x (64 MiB physical per TC) keeps compiler-scratch headroom.
    vmem_need = 2 * (tm * Kg * 2 + tm * Cpad * 2) + Kg * Cpad * 2 + Cpad * 4
    vmem_limit = int(min(48 << 20, max(8 << 20, 2 * vmem_need + (2 << 20))))

    out = pl.pallas_call(
        _conv_mm_kernel,
        out_shape=jax.ShapeDtypeStruct((Mg_p, Cpad), jnp.bfloat16),
        grid_spec=pltpu.PrefetchScalarGridSpec(
            num_scalar_prefetch=0,
            grid=(Mg_p // tm,),
            in_specs=[
                pl.BlockSpec((tm, Kg), lambda i: (i, 0)),
                pl.BlockSpec((Kg, Cpad), lambda i: (0, 0)),
                pl.BlockSpec((1, Cpad), lambda i: (0, 0)),
            ],
            out_specs=pl.BlockSpec((tm, Cpad), lambda i: (i, 0)),
        ),
        compiler_params=pltpu.CompilerParams(
            dimension_semantics=("parallel",),
            vmem_limit_bytes=vmem_limit,
        ),
        cost_estimate=cost,
    )(pg, w_packed, b_packed)

    if Cpad == group * c_out:                   # pixel-packed lane-dense output
        y = out.reshape(Mg_p * group, c_out)[:M]
    else:                                       # group == 1, zero-padded channels
        y = out[:M, :c_out]
    return y.reshape(N, Ho, Wo, c_out)          # bf16 NHWC


# ----------------------------------------------------------------------------
# Nearest-neighbor mask resize == F.interpolate(mask[None].float(), size).bool()
# Pure gather on a tiny bool tensor — a Pallas kernel here is launch overhead.
# ----------------------------------------------------------------------------
def interpolate_mask_nearest(mask_bool, out_h, out_w):
    N, H, W = mask_bool.shape
    idx_h = (jnp.arange(out_h) * H) // out_h    # PyTorch 'nearest': floor(dst*scale)
    idx_w = (jnp.arange(out_w) * W) // out_w
    return mask_bool[:, idx_h][:, :, idx_w]


# ----------------------------------------------------------------------------
# BackboneBase equivalent
# ----------------------------------------------------------------------------
class BackboneBasePallas:
    def __init__(self, key, train_backbone: bool, num_channels: int,
                 return_interm_layers: bool, in_channels: int = 4,
                 widths=(8, 16, 32, 64)):
        # train_backbone only toggles requires_grad in PyTorch — no forward effect.
        del train_backbone
        assert widths[-1] == num_channels
        self.num_channels = num_channels
        self.return_layers = ({0: "0", 1: "1", 2: "2", 3: "3"}
                              if return_interm_layers else {3: "0"})
        self.params = []    # original (OIHW f32 weight, bias) — for reference check
        self.packed = []    # (w (gK, Cpad) bf16, b (1, Cpad) f32, c_out, group)
        c_in = in_channels
        for c_out in widths:
            key, k1, k2 = jax.random.split(key, 3)
            w = jax.random.normal(k1, (c_out, c_in, 3, 3), jnp.float32)
            w = w * (1.0 / (3 * 3 * c_in) ** 0.5)
            b = 0.01 * jax.random.normal(k2, (c_out,), jnp.float32)
            self.params.append((w, b))

            # Repack once: tap-major (9C, c_out), then block-diagonal over
            # `group` output pixels so stores are lane-dense without channel pad.
            K = 9 * c_in
            g = _LANE // c_out if (c_out <= _LANE and _LANE % c_out == 0) else 1
            c_pad = _round_up(g * c_out, _LANE)
            w2 = jnp.transpose(w, (2, 3, 1, 0)).reshape(K, c_out)        # f32
            w_bd = jnp.kron(jnp.eye(g, dtype=jnp.float32), w2)          # (gK, g*c_out)
            w_bd = jnp.pad(w_bd, ((0, 0), (0, c_pad - g * c_out)))
            w_bd = w_bd.astype(jnp.bfloat16)
            b2 = jnp.pad(jnp.tile(b, g), (0, c_pad - g * c_out))
            b2 = b2.reshape(1, c_pad).astype(jnp.float32)
            self.packed.append((w_bd, b2, c_out, g))
            c_in = c_out

    def forward(self, tensors, mask):
        # tensors: (N, C, H, W) float32 ; mask: (N, H, W) bool
        x = jnp.transpose(tensors, (0, 2, 3, 1))          # NCHW -> NHWC, once
        feats_nhwc = {}
        # TODO(synk): fuse the small later stages into a single pallas_call.
        for li, (w2, b2, c_out, g) in enumerate(self.packed):
            x = conv3x3_s2_relu_nhwc(x, w2, b2, c_out, g)  # bf16 trunk
            if li in self.return_layers:
                feats_nhwc[self.return_layers[li]] = x

        out = {}
        for name, f in feats_nhwc.items():
            fh, fw = f.shape[1], f.shape[2]
            m_out = interpolate_mask_nearest(mask, fh, fw)
            feat_nchw = jnp.transpose(f, (0, 3, 1, 2)).astype(jnp.float32)
            out[name] = (feat_nchw, m_out)                 # NestedTensor(x, mask)
        return out


# ----------------------------------------------------------------------------
# Reference (plain JAX; bf16 MXU operands, f32 accumulate, bf16 trunk storage —
# exactly mirroring the kernel path)
# ----------------------------------------------------------------------------
def _ref_conv(x, w, b):
    y = jax.lax.conv_general_dilated(
        x.astype(jnp.bfloat16), w.astype(jnp.bfloat16),
        window_strides=(2, 2), padding=((1, 1), (1, 1)),
        dimension_numbers=("NCHW", "OIHW", "NCHW"),
        preferred_element_type=jnp.float32)
    y = jnp.maximum(y + b[None, :, None, None], 0.0)
    return y.astype(jnp.bfloat16)


if __name__ == "__main__":
    key = jax.random.PRNGKey(0)
    key, kx = jax.random.split(key)

    N, C, H, W = 2, 4, 16, 16
    x = jax.random.normal(kx, (N, C, H, W), jnp.float32)
    # padding mask: True where padded (right-side padding of different widths)
    cols = jnp.arange(W)[None, None, :]
    valid_w = jnp.array([12, 14])[:, None, None]
    mask = jnp.broadcast_to(cols >= valid_w, (N, H, W))

    model = BackboneBasePallas(key, train_backbone=True, num_channels=64,
                               return_interm_layers=True, in_channels=C)

    out = model.forward(x, mask)
    out = jax.tree_util.tree_map(jax.block_until_ready, out)

    # ---- correctness check vs plain-JAX reference ----
    ref = x
    ref_feats = {}
    for li, (w, b) in enumerate(model.params):
        ref = _ref_conv(ref, w, b)                      # bf16 between stages
        if li in model.return_layers:
            ref_feats[model.return_layers[li]] = ref.astype(jnp.float32)

    ok = True
    for name, (feat, m_out) in out.items():
        rf = ref_feats[name]
        ok &= bool(jnp.allclose(feat, rf, atol=2e-2, rtol=2e-2))
        fh, fw = feat.shape[-2:]
        ref_mask = mask[:, :: H // fh, :: W // fw]
        ok &= bool(jnp.array_equal(m_out, ref_mask))
        ok &= (feat.shape[0] == N and m_out.shape == (N, fh, fw)
               and m_out.dtype == jnp.bool_)
    assert ok, "Pallas output mismatch vs reference"
    print("KERNEL_OK")
</pallas_src>

<mosaic_0001>
module attributes {stable_mosaic.version = 11 : i64} {
  func.func @_conv_mm_kernel(%arg0: i32, %arg1: memref<16x576xbf16, #tpu.memory_space<vmem>>, %arg2: memref<576x128xbf16, #tpu.memory_space<vmem>>, %arg3: memref<1x128xf32, #tpu.memory_space<vmem>>, %arg4: memref<16x128xbf16, #tpu.memory_space<vmem>>) attributes {dimension_semantics = [#tpu.dimension_semantics<parallel>], iteration_bounds = array<i64: 1>, scalar_prefetch = 0 : i64, scratch_operands = 0 : i64, tpu.core_type = #tpu.core_type<tc>, window_params = [{transform_indices = @transform_0, window_bounds = array<i64: 16, 576>}, {pipeline_mode = #tpu.pipeline_mode<synchronous>, transform_indices = @transform_1, window_bounds = array<i64: 576, 128>}, {pipeline_mode = #tpu.pipeline_mode<synchronous>, transform_indices = @transform_2, window_bounds = array<i64: 1, 128>}, {transform_indices = @transform_3, window_bounds = array<i64: 16, 128>}]} {
    %c0 = arith.constant 0 : index
    %c0_0 = arith.constant 0 : index
    %0 = vector.load %arg1[%c0, %c0_0] : memref<16x576xbf16, #tpu.memory_space<vmem>>, vector<16x576xbf16>
    %c0_1 = arith.constant 0 : index
    %c0_2 = arith.constant 0 : index
    %1 = vector.load %arg2[%c0_1, %c0_2] : memref<576x128xbf16, #tpu.memory_space<vmem>>, vector<576x128xbf16>
    %cst = arith.constant dense<0.000000e+00> : vector<16x128xf32>
    %2 = tpu.matmul %0, %1, %cst {dimension_numbers = #tpu.dot_dimension_numbers<[1], [0], [0], [1], [0, 0, 1, 1], [], []>} : vector<16x576xbf16>, vector<576x128xbf16>, vector<16x128xf32> -> vector<16x128xf32>
    %c0_3 = arith.constant 0 : index
    %c0_4 = arith.constant 0 : index
    %3 = vector.load %arg3[%c0_3, %c0_4] : memref<1x128xf32, #tpu.memory_space<vmem>>, vector<1x128xf32>
    %4 = vector.broadcast %3 : vector<1x128xf32> to vector<16x128xf32>
    %5 = arith.addf %2, %4 : vector<16x128xf32>
    %cst_5 = arith.constant 0.000000e+00 : f32
    %6 = vector.broadcast %cst_5 : f32 to vector<16x128xf32>
    %7 = arith.maximumf %5, %6 : vector<16x128xf32>
    %8 = arith.truncf %7 : vector<16x128xf32> to vector<16x128xbf16>
    %c0_6 = arith.constant 0 : index
    %c0_7 = arith.constant 0 : index
    %9 = vector.load %arg4[%c0_6, %c0_7] : memref<16x128xbf16, #tpu.memory_space<vmem>>, vector<16x128xbf16>
    tpu.vector_store %arg4[%c0_6, %c0_7], %8 {strides = array<i32>} : memref<16x128xbf16, #tpu.memory_space<vmem>>, vector<16x128xbf16>,
    return
  }
  func.func @transform_0(%arg0: i32) -> (i32, i32) {
    %c0_i32 = arith.constant 0 : i32
    %c0_i32_0 = arith.constant 0 : i32
    return %arg0, %c0_i32 : i32, i32
  }
  func.func @transform_1(%arg0: i32) -> (i32, i32) {
    %c0_i32 = arith.constant 0 : i32
    %c0_i32_0 = arith.constant 0 : i32
    %c0_i32_1 = arith.constant 0 : i32
    return %c0_i32, %c0_i32_0 : i32, i32
  }
  func.func @transform_2(%arg0: i32) -> (i32, i32) {
    %c0_i32 = arith.constant 0 : i32
    %c0_i32_0 = arith.constant 0 : i32
    %c0_i32_1 = arith.constant 0 : i32
    return %c0_i32, %c0_i32_0 : i32, i32
  }
  func.func @transform_3(%arg0: i32) -> (i32, i32) {
    %c0_i32 = arith.constant 0 : i32
    %c0_i32_0 = arith.constant 0 : i32
    return %arg0, %c0_i32 : i32, i32
  }
}

</mosaic_0001>

<llo_original>
// kernel: tpu_custom_call.1
$region0: #{tpu_custom_call.1}
  #allocation0 [shape = 'u32[]', space=smem, size = 0x4, offset = 0x4, fixed_abs, tag = 'smem constant byte address 0x4 - core index']
  #allocation1 [shape = 'u32[72,128]{1,0:T(1,128)}', space=vmem, size = 0x9000, scoped, tag = 'internal scratch']
  %s0 = inlined_call_operand.hbm [shape: bf16[16,576], index: 0, kind: input, shape index: {}]
  %s1 = inlined_call_operand.hbm [shape: bf16[576,128], index: 1, kind: input, shape index: {}]
  %s2 = inlined_call_operand.vmem [shape: f32[1,128], index: 2, kind: input, shape index: {}]
  %s3 = inlined_call_operand.hbm [shape: bf16[16,128], index: 3, kind: output, shape index: {}]
  %s4 = sld [smem:[#allocation0]]
  $region30: #{tpu_custom_call.1} parent=0
    _
  %s6 = ssub.s32 1, %s4
  %s7 = scalar_select 0, %s6, %s4
  $region1: #{tpu_custom_call.1} parent=0
    #allocation2 [shape = 'u8[20480]{0}', space=vmem, size = 0x5000, scoped, tag = 'input window, operand 0, single buffered']
    #allocation3 [shape = 's32[1]{0}', space=sflag, size = 0x4, scoped, tag = 'scoped memory for tpu_custom_call.1']
    #allocation4 [shape = 's32[1]{0}', space=sflag, size = 0x4, scoped, tag = 'scoped memory for tpu_custom_call.1']
    #allocation5 [shape = 'u8[147456]{0}', space=vmem, size = 0x24000, scoped, tag = 'input window, operand 1, single buffered']
    #allocation6 [shape = 's32[1]{0}', space=sflag, size = 0x4, scoped, tag = 'scoped memory for tpu_custom_call.1']
    #allocation7 [shape = 'u8[4096]{0}', space=vmem, size = 0x1000, scoped, tag = 'output window, operand 0, single buffered']
    %8 = vsyncpa [#allocation3], 0
    %9 = vsyncpa [#allocation6], 0
    %10 = vsyncpa [#allocation4], 0
    // Predicated region
    $region2: #{tpu_custom_call.1} parent=1 // pred_check
      _
    $region3: #{tpu_custom_call.1} parent=1 // pred_check_branch
      %12 = sbr.rel (0) target = $region5
    $region4: #{tpu_custom_call.1} parent=1 // pred_region
      %14 = vsyncadd [#allocation3], 0
      %s15 = sshll.u32 %s0, 4
      %s16 = int_to_ptr.hbm [resolvable:$true] %s15
      %s17 = sshll.u32 [#allocation2], 4
      %s18 = int_to_ptr.vmem [resolvable:$true] %s17
      %23 = dma.hbm_to_vmem [thread:$0]  %s16, 640, %s18, [#allocation3], 320, 320, 20
    $region5: #{tpu_custom_call.1} parent=1 // pred_fallthru
      _
    // Predicated region
    $region6: #{tpu_custom_call.1} parent=1 // pred_check
      _
    $region7: #{tpu_custom_call.1} parent=1 // pred_check_branch
      %25 = sbr.rel (0) target = $region9
    $region8: #{tpu_custom_call.1} parent=1 // pred_region
      %27 = vsyncadd [#allocation6], 0
      %s28 = sshll.u32 %s1, 4
      %s29 = int_to_ptr.hbm [resolvable:$true] %s28
      %s30 = sshll.u32 [#allocation5], 4
      %s31 = int_to_ptr.vmem [resolvable:$true] %s30
      %36 = dma.hbm_to_vmem [thread:$0]  %s29, 4608, %s31, [#allocation6], 64, 64, 4
    $region9: #{tpu_custom_call.1} parent=1 // pred_fallthru
      _
    // Predicated region
    $region10: #{tpu_custom_call.1} parent=1 // pred_check
      _
    $region11: #{tpu_custom_call.1} parent=1 // pred_check_branch
      %38 = sbr.rel (0) target = $region13
    $region12: #{tpu_custom_call.1} parent=1 // pred_region
      _
    $region13: #{tpu_custom_call.1} parent=1 // pred_fallthru
      _
    // Predicated region
    $region14: #{tpu_custom_call.1} parent=1 // pred_check
      _
    $region15: #{tpu_custom_call.1} parent=1 // pred_check_branch
      %40 = sbr.rel (0) target = $region17
    $region16: #{tpu_custom_call.1} parent=1 // pred_region
      %42 = dma.done [#allocation3], 640
    $region17: #{tpu_custom_call.1} parent=1 // pred_fallthru
      _
    // Predicated region
    $region18: #{tpu_custom_call.1} parent=1 // pred_check
      _
    $region19: #{tpu_custom_call.1} parent=1 // pred_check_branch
      %44 = sbr.rel (0) target = $region21
    $region20: #{tpu_custom_call.1} parent=1 // pred_region
      %46 = dma.done [#allocation6], 4608
    $region21: #{tpu_custom_call.1} parent=1 // pred_fallthru
      _
    %v48 = vld [vmem:[#allocation2] sm:$0xff]
    %v49 = vld [vmem:[#allocation2 + $0x8] sm:$0xff]
    %v50 = vld [vmem:[#allocation2 + $0x10] sm:$0xf]
    %v51 = vld [vmem:[#allocation2 + $0x14] sm:$0xff]
    %v52 = vld [vmem:[#allocation2 + $0x1c] sm:$0xff]
    %v53 = vld [vmem:[#allocation2 + $0x24] sm:$0xf]
    %v54 = vld [vmem:[#allocation5] sm:$0xf]
    %v55 = vld [vmem:[#allocation5 + $0x4] sm:$0xf]
    %v56 = vld [vmem:[#allocation5 + $0x8] sm:$0xf]
    %v57 = vld [vmem:[#allocation5 + $0xc] sm:$0xf]
    %v58 = vld [vmem:[#allocation5 + $0x10] sm:$0xf]
    %v59 = vld [vmem:[#allocation5 + $0x14] sm:$0xf]
    %v60 = vld [vmem:[#allocation5 + $0x18] sm:$0xf]
    %v61 = vld [vmem:[#allocation5 + $0x1c] sm:$0xf]
    %v62 = vld [vmem:[#allocation5 + $0x20] sm:$0xf]
    %v63 = vld [vmem:[#allocation5 + $0x24] sm:$0xf]
    %v64 = vld [vmem:[#allocation5 + $0x28] sm:$0xf]
    %v65 = vld [vmem:[#allocation5 + $0x2c] sm:$0xf]
    %v66 = vld [vmem:[#allocation5 + $0x30] sm:$0xf]
    %v67 = vld [vmem:[#allocation5 + $0x34] sm:$0xf]
    %v68 = vld [vmem:[#allocation5 + $0x38] sm:$0xf]
    %v69 = vld [vmem:[#allocation5 + $0x3c] sm:$0xf]
    %v70 = vld [vmem:[#allocation5 + $0x40] sm:$0xf]
    %v71 = vld [vmem:[#allocation5 + $0x44] sm:$0xf]
    %v72 = vld [vmem:[#allocation5 + $0x48] sm:$0xf]
    %v73 = vld [vmem:[#allocation5 + $0x4c] sm:$0xf]
    %v74 = vld [vmem:[#allocation5 + $0x50] sm:$0xf]
    %v75 = vld [vmem:[#allocation5 + $0x54] sm:$0xf]
    %v76 = vld [vmem:[#allocation5 + $0x58] sm:$0xf]
    %v77 = vld [vmem:[#allocation5 + $0x5c] sm:$0xf]
    %v78 = vld [vmem:[#allocation5 + $0x60] sm:$0xf]
    %v79 = vld [vmem:[#allocation5 + $0x64] sm:$0xf]
    %v80 = vld [vmem:[#allocation5 + $0x68] sm:$0xf]
    %v81 = vld [vmem:[#allocation5 + $0x6c] sm:$0xf]
    %v82 = vld [vmem:[#allocation5 + $0x70] sm:$0xf]
    %v83 = vld [vmem:[#allocation5 + $0x74] sm:$0xf]
    %v84 = vld [vmem:[#allocation5 + $0x78] sm:$0xf]
    %v85 = vld [vmem:[#allocation5 + $0x7c] sm:$0xf]
    %v86 = vld [vmem:[#allocation5 + $0x80] sm:$0xf]
    %v87 = vld [vmem:[#allocation5 + $0x84] sm:$0xf]
    %v88 = vld [vmem:[#allocation5 + $0x88] sm:$0xf]
    %v89 = vld [vmem:[#allocation5 + $0x8c] sm:$0xf]
    %v90 = vld [vmem:[#allocation5 + $0x90] sm:$0xf]
    %v91 = vld [vmem:[#allocation5 + $0x94] sm:$0xf]
    %v92 = vld [vmem:[#allocation5 + $0x98] sm:$0xf]
    %v93 = vld [vmem:[#allocation5 + $0x9c] sm:$0xf]
    %v94 = vld [vmem:[#allocation5 + $0xa0] sm:$0xf]
    %v95 = vld [vmem:[#allocation5 + $0xa4] sm:$0xf]
    %v96 = vld [vmem:[#allocation5 + $0xa8] sm:$0xf]
    %v97 = vld [vmem:[#allocation5 + $0xac] sm:$0xf]
    %v98 = vld [vmem:[#allocation5 + $0xb0] sm:$0xf]
    %v99 = vld [vmem:[#allocation5 + $0xb4] sm:$0xf]
    %v100 = vld [vmem:[#allocation5 + $0xb8] sm:$0xf]
    %v101 = vld [vmem:[#allocation5 + $0xbc] sm:$0xf]
    %v102 = vld [vmem:[#allocation5 + $0xc0] sm:$0xf]
    %v103 = vld [vmem:[#allocation5 + $0xc4] sm:$0xf]
    %v104 = vld [vmem:[#allocation5 + $0xc8] sm:$0xf]
    %v105 = vld [vmem:[#allocation5 + $0xcc] sm:$0xf]
    %v106 = vld [vmem:[#allocation5 + $0xd0] sm:$0xf]
    %v107 = vld [vmem:[#allocation5 + $0xd4] sm:$0xf]
    %v108 = vld [vmem:[#allocation5 + $0xd8] sm:$0xf]
    %v109 = vld [vmem:[#allocation5 + $0xdc] sm:$0xf]
    %v110 = vld [vmem:[#allocation5 + $0xe0] sm:$0xf]
    %v111 = vld [vmem:[#allocation5 + $0xe4] sm:$0xf]
    %v112 = vld [vmem:[#allocation5 + $0xe8] sm:$0xf]
    %v113 = vld [vmem:[#allocation5 + $0xec] sm:$0xf]
    %v114 = vld [vmem:[#allocation5 + $0xf0] sm:$0xf]
    %v115 = vld [vmem:[#allocation5 + $0xf4] sm:$0xf]
    %v116 = vld [vmem:[#allocation5 + $0xf8] sm:$0xf]
    %v117 = vld [vmem:[#allocation5 + $0xfc] sm:$0xf]
    %v118 = vld [vmem:[#allocation5 + $0x100] sm:$0xf]
    %v119 = vld [vmem:[#allocation5 + $0x104] sm:$0xf]
    %v120 = vld [vmem:[#allocation5 + $0x108] sm:$0xf]
    %v121 = vld [vmem:[#allocation5 + $0x10c] sm:$0xf]
    %v122 = vld [vmem:[#allocation5 + $0x110] sm:$0xf]
    %v123 = vld [vmem:[#allocation5 + $0x114] sm:$0xf]
    %v124 = vld [vmem:[#allocation5 + $0x118] sm:$0xf]
    %v125 = vld [vmem:[#allocation5 + $0x11c] sm:$0xf]
    %v126 = vld [vmem:[%s2] sm:$0x1]
    %v128 = vperm.slane %v126, 0
    %v136 = vunpack.c.l.b16 %v48
    %v137 = vunpack.c.h.b16 %v48
    %v138 = vunpack.c.l.b16 %v49
    %v139 = vunpack.c.h.b16 %v49
    %v140 = vunpack.c.l.b16 %v50
    %v141 = vunpack.c.l.b16 %v51
    %v142 = vunpack.c.h.b16 %v51
    %v143 = vunpack.c.l.b16 %v52
    %v144 = vunpack.c.h.b16 %v52
    %v145 = vunpack.c.l.b16 %v53
    %v146 = vpack.c.b16 %v141, %v136
    %v147 = vpack.c.b16 %v142, %v137
    %v148 = vpack.c.b16 %v143, %v138
    %v149 = vpack.c.b16 %v144, %v139
    %v150 = vpack.c.b16 %v145, %v140
    %v227 = vunpack.c.l.b16 %v54
    %v228 = vunpack.c.l.b16 %v55
    %v229 = vunpack.c.l.b16 %v56
    %v230 = vunpack.c.l.b16 %v57
    %v231 = vunpack.c.l.b16 %v58
    %v232 = vunpack.c.l.b16 %v59
    %v233 = vunpack.c.l.b16 %v60
    %v234 = vunpack.c.l.b16 %v61
    %v235 = vunpack.c.l.b16 %v62
    %v236 = vunpack.c.l.b16 %v63
    %v237 = vunpack.c.l.b16 %v64
    %v238 = vunpack.c.l.b16 %v65
    %v239 = vunpack.c.l.b16 %v66
    %v240 = vunpack.c.l.b16 %v67
    %v241 = vunpack.c.l.b16 %v68
    %v242 = vunpack.c.l.b16 %v69
    %v243 = vunpack.c.l.b16 %v70
    %v244 = vunpack.c.l.b16 %v71
    %v245 = vunpack.c.l.b16 %v72
    %v246 = vunpack.c.l.b16 %v73
    %v247 = vunpack.c.l.b16 %v74
    %v248 = vunpack.c.l.b16 %v75
    %v249 = vunpack.c.l.b16 %v76
    %v250 = vunpack.c.l.b16 %v77
    %v251 = vunpack.c.l.b16 %v78
    %v252 = vunpack.c.l.b16 %v79
    %v253 = vunpack.c.l.b16 %v80
    %v254 = vunpack.c.l.b16 %v81
    %v255 = vunpack.c.l.b16 %v82
    %v256 = vunpack.c.l.b16 %v83
    %v257 = vunpack.c.l.b16 %v84
    %v258 = vunpack.c.l.b16 %v85
    %v259 = vunpack.c.l.b16 %v86
    %v260 = vunpack.c.l.b16 %v87
    %v261 = vunpack.c.l.b16 %v88
    %v262 = vunpack.c.l.b16 %v89
    %v263 = vunpack.c.l.b16 %v90
    %v264 = vunpack.c.l.b16 %v91
    %v265 = vunpack.c.l.b16 %v92
    %v266 = vunpack.c.l.b16 %v93
    %v267 = vunpack.c.l.b16 %v94
    %v268 = vunpack.c.l.b16 %v95
    %v269 = vunpack.c.l.b16 %v96
    %v270 = vunpack.c.l.b16 %v97
    %v271 = vunpack.c.l.b16 %v98
    %v272 = vunpack.c.l.b16 %v99
    %v273 = vunpack.c.l.b16 %v100
    %v274 = vunpack.c.l.b16 %v101
    %v275 = vunpack.c.l.b16 %v102
    %v276 = vunpack.c.l.b16 %v103
    %v277 = vunpack.c.l.b16 %v104
    %v278 = vunpack.c.l.b16 %v105
    %v279 = vunpack.c.l.b16 %v106
    %v280 = vunpack.c.l.b16 %v107
    %v281 = vunpack.c.l.b16 %v108
    %v282 = vunpack.c.l.b16 %v109
    %v283 = vunpack.c.l.b16 %v110
    %v284 = vunpack.c.l.b16 %v111
    %v285 = vunpack.c.l.b16 %v112
    %v286 = vunpack.c.l.b16 %v113
    %v287 = vunpack.c.l.b16 %v114
    %v288 = vunpack.c.l.b16 %v115
    %v289 = vunpack.c.l.b16 %v116
    %v290 = vunpack.c.l.b16 %v117
    %v291 = vunpack.c.l.b16 %v118
    %v292 = vunpack.c.l.b16 %v119
    %v293 = vunpack.c.l.b16 %v120
    %v294 = vunpack.c.l.b16 %v121
    %v295 = vunpack.c.l.b16 %v122
    %v296 = vunpack.c.l.b16 %v123
    %v297 = vunpack.c.l.b16 %v124
    %v298 = vunpack.c.l.b16 %v125
    %v299 = vpack.c.b16 %v228, %v227
    %v300 = vpack.c.b16 %v230, %v229
    %v301 = vpack.c.b16 %v232, %v231
    %v302 = vpack.c.b16 %v234, %v233
    %v303 = vpack.c.b16 %v236, %v235
    %v304 = vpack.c.b16 %v238, %v237
    %v305 = vpack.c.b16 %v240, %v239
    %v306 = vpack.c.b16 %v242, %v241
    %v307 = vpack.c.b16 %v244, %v243
    %v308 = vpack.c.b16 %v246, %v245
    %v309 = vpack.c.b16 %v248, %v247
    %v310 = vpack.c.b16 %v250, %v249
    %v311 = vpack.c.b16 %v252, %v251
    %v312 = vpack.c.b16 %v254, %v253
    %v313 = vpack.c.b16 %v256, %v255
    %v314 = vpack.c.b16 %v258, %v257
    %v315 = vpack.c.b16 %v260, %v259
    %v316 = vpack.c.b16 %v262, %v261
    %v317 = vpack.c.b16 %v264, %v263
    %v318 = vpack.c.b16 %v266, %v265
    %v319 = vpack.c.b16 %v268, %v267
    %v320 = vpack.c.b16 %v270, %v269
    %v321 = vpack.c.b16 %v272, %v271
    %v322 = vpack.c.b16 %v274, %v273
    %v323 = vpack.c.b16 %v276, %v275
    %v324 = vpack.c.b16 %v278, %v277
    %v325 = vpack.c.b16 %v280, %v279
    %v326 = vpack.c.b16 %v282, %v281
    %v327 = vpack.c.b16 %v284, %v283
    %v328 = vpack.c.b16 %v286, %v285
    %v329 = vpack.c.b16 %v288, %v287
    %v330 = vpack.c.b16 %v290, %v289
    %v331 = vpack.c.b16 %v292, %v291
    %v332 = vpack.c.b16 %v294, %v293
    %v333 = vpack.c.b16 %v296, %v295
    %v334 = vpack.c.b16 %v298, %v297
    %vm371 = vcmask 523264
    %v373 = vsel %vm371, %v150, 0
    %375 = vmatpush.bf16.msra.mxu0 %v306
    %376 = vmatpush.bf16.msra.mxu0 %v305
    %377 = vmatpush.bf16.msra.mxu0 %v304
    %378 = vmatpush.bf16.msra.mxu0 %v303
    %379 = vmatpush.bf16.msra.mxu0 %v302
    %380 = vmatpush.bf16.msra.mxu0 %v301
    %381 = vmatpush.bf16.msra.mxu0 %v300
    %382 = vmatpush.bf16.msra.mxu0 %v299
    %383 = vmatmul.bf16.gmra.mxu0 %v146
    %v384 = vpop.f32.mrf.mxu0
    %v385 = vadd.f32 %v128, %v384
    %v386 = vpop.f32.mrf.mxu0
    %v387 = vadd.f32 %v128, %v386
    %388 = vdwg.mxu0
    %389 = vmatpush.bf16.msra.mxu0 %v314
    %390 = vmatpush.bf16.msra.mxu0 %v313
    %391 = vmatpush.bf16.msra.mxu0 %v312
    %392 = vmatpush.bf16.msra.mxu0 %v311
    %393 = vmatpush.bf16.msra.mxu0 %v310
    %394 = vmatpush.bf16.msra.mxu0 %v309
    %395 = vmatpush.bf16.msra.mxu0 %v308
    %396 = vmatpush.bf16.msra.mxu0 %v307
    %397 = vmatmul.bf16.gmra.mxu0 %v147
    %v398 = vpop.f32.mrf.mxu0
    %v399 = vadd.f32 %v385, %v398
    %v400 = vpop.f32.mrf.mxu0
    %v401 = vadd.f32 %v387, %v400
    %402 = vdwg.mxu0
    %403 = vmatpush.bf16.msra.mxu0 %v322
    %404 = vmatpush.bf16.msra.mxu0 %v321
    %405 = vmatpush.bf16.msra.mxu0 %v320
    %406 = vmatpush.bf16.msra.mxu0 %v319
    %407 = vmatpush.bf16.msra.mxu0 %v318
    %408 = vmatpush.bf16.msra.mxu0 %v317
    %409 = vmatpush.bf16.msra.mxu0 %v316
    %410 = vmatpush.bf16.msra.mxu0 %v315
    %411 = vmatmul.bf16.gmra.mxu0 %v148
    %v412 = vpop.f32.mrf.mxu0
    %v413 = vadd.f32 %v399, %v412
    %v414 = vpop.f32.mrf.mxu0
    %v415 = vadd.f32 %v401, %v414
    %416 = vdwg.mxu0
    %417 = vmatpush.bf16.msra.mxu0 %v330
    %418 = vmatpush.bf16.msra.mxu0 %v329
    %419 = vmatpush.bf16.msra.mxu0 %v328
    %420 = vmatpush.bf16.msra.mxu0 %v327
    %421 = vmatpush.bf16.msra.mxu0 %v326
    %422 = vmatpush.bf16.msra.mxu0 %v325
    %423 = vmatpush.bf16.msra.mxu0 %v324
    %424 = vmatpush.bf16.msra.mxu0 %v323
    %425 = vmatmul.bf16.gmra.mxu0 %v149
    %v426 = vpop.f32.mrf.mxu0
    %v427 = vadd.f32 %v413, %v426
    %v428 = vpop.f32.mrf.mxu0
    %v429 = vadd.f32 %v415, %v428
    %430 = vdwg.mxu0
    %431 = vmatpush.bf16.msra.mxu0 0
    %432 = vmatpush.bf16.msra.mxu0 0
    %433 = vmatpush.bf16.msra.mxu0 0
    %434 = vmatpush.bf16.msra.mxu0 0
    %435 = vmatpush.bf16.msra.mxu0 %v334
    %436 = vmatpush.bf16.msra.mxu0 %v333
    %437 = vmatpush.bf16.msra.mxu0 %v332
    %438 = vmatpush.bf16.msra.mxu0 %v331
    %439 = vmatmul.bf16.gmra.mxu0 %v373
    %v440 = vpop.f32.mrf.mxu0
    %v441 = vadd.f32 %v427, %v440
    %v442 = vpop.f32.mrf.mxu0
    %v443 = vadd.f32 %v429, %v442
    %444 = vdwg.mxu0
    %v445 = vmax.f32 %v441, 0.0
    %v446 = vmax.f32 %v443, 0.0
    %v447 = vpack.c.bf16 %v445, %v445
    %v448 = vpack.c.bf16 %v446, %v446
    %449 = vst [vmem:[#allocation7] sm:$0xf] %v447
    %450 = vst [vmem:[#allocation7 + $0x4] sm:$0xf] %v448
    // Predicated region
    $region22: #{tpu_custom_call.1} parent=1 // pred_check
      _
    $region23: #{tpu_custom_call.1} parent=1 // pred_check_branch
      %452 = sbr.rel (0) target = $region25
    $region24: #{tpu_custom_call.1} parent=1 // pred_region
      %454 = vsyncadd [#allocation4], 0
      %s455 = sshll.u32 [#allocation7], 4
      %s456 = int_to_ptr.vmem [resolvable:$true] %s455
      %s457 = sshll.u32 %s3, 4
      %s458 = int_to_ptr.hbm [resolvable:$true] %s457
      %463 = dma.vmem_to_hbm [thread:$0]  %s456, 128, %s458, [#allocation4], 64, 64, 4
    $region25: #{tpu_custom_call.1} parent=1 // pred_fallthru
      _
    // Predicated region
    $region26: #{tpu_custom_call.1} parent=1 // pred_check
      _
    $region27: #{tpu_custom_call.1} parent=1 // pred_check_branch
      %465 = sbr.rel (0) target = $region29
    $region28: #{tpu_custom_call.1} parent=1 // pred_region
      %467 = dma.done [#allocation4], 128
    $region29: #{tpu_custom_call.1} parent=1 // pred_fallthru
      _
    %468 = vsyncpa [#allocation3], 1
    %469 = vsyncpa [#allocation6], 1
    %470 = vsyncpa [#allocation4], 1

</llo_original>
